<compile_context>
chip_gen: v7x
topology: tpu7x:2x2x1
jax: 0.10.0
libtpu: 0.0.40
codegen_flags: <defaults>
</compile_context>

<pallas_src>
import functools
import math

import jax
import jax.numpy as jnp
from jax.experimental import pallas as pl
from jax.experimental.pallas import tpu as pltpu


# ------------------------------ small helpers ------------------------------

def _pick_tile(dim, candidates):
    """Largest candidate that evenly divides dim, else the full dim."""
    for c in candidates:
        if dim >= c and dim % c == 0:
            return c
    return dim


def _pick_head_group(n_head, dh, max_group=4):
    """Heads per attention grid step; prefer lane width that is a 128-multiple."""
    for hg in range(min(n_head, max_group), 0, -1):
        if n_head % hg == 0 and (hg * dh) % 128 == 0:
            return hg
    return n_head  # full hidden dim as one block (always layout-legal)


def _vmem_limit(buffer_bytes, extra_bytes=0):
    """Explicit scoped-VMEM budget: double-buffered blocks + scratch + margin."""
    total = sum(2 * int(b) for b in buffer_bytes) + int(extra_bytes) + (16 << 20)
    return int(min(total, 48 << 20))


# --------------------------- fused linear kernel ----------------------------
# y = [res +] act( LN?(x) @ W + b )   tiled over (M, N, K) with f32 accumulator.

def _fused_linear_kernel(*refs, activation, fuse_ln, add_residual, n_k):
    x_ref, w_ref, b_ref = refs[:3]
    pos = 3
    if fuse_ln:
        g_ref, bt_ref = refs[pos:pos + 2]
        pos += 2
    if add_residual:
        r_ref = refs[pos]
        pos += 1
    o_ref, acc_ref = refs[pos], refs[pos + 1]

    k = pl.program_id(2)

    @pl.when(k == 0)
    def _():
        acc_ref[...] = jnp.zeros_like(acc_ref)

    x = x_ref[...]
    if fuse_ln:
        x = x.astype(jnp.float32)
        mu = jnp.mean(x, axis=-1, keepdims=True)
        var = jnp.mean((x - mu) ** 2, axis=-1, keepdims=True)
        x = (x - mu) * jax.lax.rsqrt(var + jnp.float32(1e-5))
        x = x * g_ref[...] + bt_ref[...]

    acc_ref[...] += jnp.dot(x.astype(jnp.bfloat16), w_ref[...],
                            preferred_element_type=jnp.float32)

    @pl.when(k == n_k - 1)
    def _():
        y = acc_ref[...] + b_ref[...]
        if activation == "gelu":
            # GPT-2 "gelu_new" == tanh-approximate GELU, in f32
            y = jax.nn.gelu(y, approximate=True)
        if add_residual:
            y = y + r_ref[...].astype(jnp.float32)
        o_ref[...] = y.astype(o_ref.dtype)


def fused_linear(x, w, b, *, gamma=None, beta=None, residual=None,
                 activation="none", out_dtype=jnp.float32):
    M, K = x.shape
    Kw, N = w.shape
    assert Kw == K
    fuse_ln = gamma is not None
    add_res = residual is not None

    tm = _pick_tile(M, (256, 128, 64, 32, 16, 8))
    tn = _pick_tile(N, (512, 256, 128))
    # LN needs the full feature row -> keep K un-tiled when the LN is fused.
    tk = K if fuse_ln else _pick_tile(K, (512, 256, 128))
    n_k = K // tk
    grid = (M // tm, N // tn, n_k)

    inputs = [x, w, b.reshape(1, N)]
    in_specs = [
        pl.BlockSpec((tm, tk), lambda i, j, k: (i, k)),
        pl.BlockSpec((tk, tn), lambda i, j, k: (k, j)),
        pl.BlockSpec((1, tn), lambda i, j, k: (0, j)),
    ]
    buf_bytes = [tm * tk * x.dtype.itemsize,
                 tk * tn * w.dtype.itemsize,
                 tn * 4,
                 tm * tn * jnp.dtype(out_dtype).itemsize]
    if fuse_ln:
        inputs += [gamma.reshape(1, K), beta.reshape(1, K)]
        in_specs += [pl.BlockSpec((1, tk), lambda i, j, k: (0, k)),
                     pl.BlockSpec((1, tk), lambda i, j, k: (0, k))]
        buf_bytes += [tk * 4, tk * 4]
    if add_res:
        inputs.append(residual)
        in_specs.append(pl.BlockSpec((tm, tn), lambda i, j, k: (i, j)))
        buf_bytes.append(tm * tn * 4)

    kern = functools.partial(_fused_linear_kernel, activation=activation,
                             fuse_ln=fuse_ln, add_residual=add_res, n_k=n_k)

    return pl.pallas_call(
        kern,
        out_shape=jax.ShapeDtypeStruct((M, N), out_dtype),
        grid=grid,
        in_specs=in_specs,
        out_specs=pl.BlockSpec((tm, tn), lambda i, j, k: (i, j)),
        scratch_shapes=[pltpu.VMEM((tm, tn), jnp.float32)],
        # residual stream is updated in place
        input_output_aliases=({len(inputs) - 1: 0} if add_res else {}),
        compiler_params=pltpu.CompilerParams(
            dimension_semantics=("parallel", "parallel", "arbitrary"),
            vmem_limit_bytes=_vmem_limit(buf_bytes, extra_bytes=tm * tn * 4)),
    )(*inputs)


# ------------------------------ attention kernel ----------------------------
# One grid step = (batch b, head-group g).  q/k/v blocks are read directly out
# of the (B, S, D) slabs (no head transposes); output is written back into a
# (B, S, D) slab so the reshape to (B*S, D) is a free view.
# TODO(synk): for long sequences convert to a flash-style online-softmax kernel
#             with a KV grid axis instead of the full (S, S) score matrix.

def _attention_kernel(q_ref, k_ref, v_ref, mb_ref, o_ref, *, scale, dh, hg):
    q = q_ref[...]                                            # (S, hg*dh) bf16
    k = k_ref[...]
    v = v_ref[...]
    S = q.shape[0]

    # additive bias (causal + key padding), built once per grid step
    row = jax.lax.broadcasted_iota(jnp.int32, (S, S), 0)
    col = jax.lax.broadcasted_iota(jnp.int32, (S, S), 1)
    bias = jnp.where(row >= col, jnp.float32(0.0), jnp.float32(-1e30))
    bias = bias + mb_ref[...]                                 # (1, S) broadcast

    outs = []
    for h in range(hg):                                       # unrolled, hg small
        sl = slice(h * dh, (h + 1) * dh)
        qh, kh, vh = q[:, sl], k[:, sl], v[:, sl]
        # q @ k^T without materializing k.T
        s = jax.lax.dot_general(qh, kh, (((1,), (1,)), ((), ())),
                                preferred_element_type=jnp.float32)
        s = s * jnp.float32(scale) + bias
        m = jnp.max(s, axis=-1, keepdims=True)
        p = jnp.exp(s - m)
        denom = jnp.sum(p, axis=-1, keepdims=True)
        p = p * pl.reciprocal(denom, approx=True)
        outs.append(jnp.dot(p.astype(jnp.bfloat16), vh,
                            preferred_element_type=jnp.float32))
    o_ref[...] = jnp.concatenate(outs, axis=-1).astype(o_ref.dtype)


def attention(q, k, v, mask_bias, *, n_head, scale):
    B, S, D = q.shape
    dh = D // n_head
    hg = _pick_head_group(n_head, dh)
    Wg = hg * dh
    n_groups = n_head // hg
    mb = mask_bias.reshape(B, 1, S)

    kern = functools.partial(_attention_kernel, scale=scale, dh=dh, hg=hg)
    buf_bytes = [S * Wg * q.dtype.itemsize] * 3 + [S * 4, S * Wg * 2]
    extra = 4 * hg * S * S * 4        # score / softmax transients (rough)

    return pl.pallas_call(
        kern,
        out_shape=jax.ShapeDtypeStruct((B, S, D), jnp.bfloat16),
        grid=(B, n_groups),
        in_specs=[
            pl.BlockSpec((None, S, Wg), lambda b, g: (b, 0, g)),
            pl.BlockSpec((None, S, Wg), lambda b, g: (b, 0, g)),
            pl.BlockSpec((None, S, Wg), lambda b, g: (b, 0, g)),
            pl.BlockSpec((None, 1, S), lambda b, g: (b, 0, 0)),
        ],
        out_specs=pl.BlockSpec((None, S, Wg), lambda b, g: (b, 0, g)),
        compiler_params=pltpu.CompilerParams(
            dimension_semantics=("parallel", "parallel"),
            vmem_limit_bytes=_vmem_limit(buf_bytes, extra_bytes=extra)),
    )(q, k, v, mb)


# ----------------------------- final layernorm ------------------------------

def _layernorm_kernel(x_ref, g_ref, b_ref, o_ref):
    x = x_ref[...].astype(jnp.float32)
    mu = jnp.mean(x, axis=-1, keepdims=True)
    var = jnp.mean((x - mu) ** 2, axis=-1, keepdims=True)
    xn = (x - mu) * jax.lax.rsqrt(var + jnp.float32(1e-5))
    o_ref[...] = (xn * g_ref[...] + b_ref[...]).astype(o_ref.dtype)


def layernorm(x2d, gamma, beta):
    M, D = x2d.shape
    tm = _pick_tile(M, (256, 128, 64, 32, 16, 8))
    buf_bytes = [tm * D * 4, D * 4, D * 4, tm * D * 4]
    return pl.pallas_call(
        _layernorm_kernel,
        out_shape=jax.ShapeDtypeStruct((M, D), jnp.float32),
        grid=(M // tm,),
        in_specs=[pl.BlockSpec((tm, D), lambda i: (i, 0)),
                  pl.BlockSpec((1, D), lambda i: (0, 0)),
                  pl.BlockSpec((1, D), lambda i: (0, 0))],
        out_specs=pl.BlockSpec((tm, D), lambda i: (i, 0)),
        compiler_params=pltpu.CompilerParams(
            dimension_semantics=("parallel",),
            vmem_limit_bytes=_vmem_limit(buf_bytes)),
    )(x2d, gamma.reshape(1, D), beta.reshape(1, D))


# ------------------------- parameters (synthetic) ----------------------------

def init_params(key, vocab, max_pos, d_model, n_head, d_ff, n_layers):
    def nrm(k, shape, std=0.02, dtype=jnp.float32):
        return (std * jax.random.normal(k, shape)).astype(dtype)

    keys = iter(jax.random.split(key, 4 + n_layers * 8))
    params = {
        "n_head": n_head,
        "wte": nrm(next(keys), (vocab, d_model)),
        "wpe": nrm(next(keys), (max_pos, d_model)),
        "lnf_g": jnp.ones((d_model,), jnp.float32),
        "lnf_b": jnp.zeros((d_model,), jnp.float32),
        "layers": [],
    }
    for _ in range(n_layers):
        params["layers"].append({
            "ln1_g": jnp.ones((d_model,), jnp.float32),
            "ln1_b": jnp.zeros((d_model,), jnp.float32),
            # matmul weights stored bf16 (f32 accumulation inside the kernels)
            "w_qkv": nrm(next(keys), (d_model, 3 * d_model), dtype=jnp.bfloat16),
            "b_qkv": jnp.zeros((3 * d_model,), jnp.float32),
            "w_o": nrm(next(keys), (d_model, d_model), dtype=jnp.bfloat16),
            "b_o": jnp.zeros((d_model,), jnp.float32),
            "ln2_g": jnp.ones((d_model,), jnp.float32),
            "ln2_b": jnp.zeros((d_model,), jnp.float32),
            "w_fc": nrm(next(keys), (d_model, d_ff), dtype=jnp.bfloat16),
            "b_fc": jnp.zeros((d_ff,), jnp.float32),
            "w_proj": nrm(next(keys), (d_ff, d_model), dtype=jnp.bfloat16),
            "b_proj": jnp.zeros((d_model,), jnp.float32),
        })
    return params


# ------------------------------ forward pass --------------------------------

def text_decoder_forward(input_ids, attention_mask, params):
    """Returns last_hidden_state of shape (batch, seq, hidden), float32."""
    B, S = input_ids.shape
    d = params["wte"].shape[1]
    n_head = params["n_head"]
    dh = d // n_head

    # TODO(synk): embedding gather done with jnp.take (glue), not a Pallas gather.
    x = jnp.take(params["wte"], input_ids, axis=0) + params["wpe"][:S][None, :, :]
    mask_bias = (1.0 - attention_mask.astype(jnp.float32)) * jnp.float32(-1e9)  # (B, S)

    x2 = x.reshape(B * S, d).astype(jnp.float32)   # residual stream, f32

    for lyr in params["layers"]:
        # LN1 fused into the QKV projection; bf16 output feeds attention.
        qkv = fused_linear(x2, lyr["w_qkv"], lyr["b_qkv"],
                           gamma=lyr["ln1_g"], beta=lyr["ln1_b"],
                           out_dtype=jnp.bfloat16)            # (B*S, 3d)
        qkv = qkv.reshape(B, S, 3 * d)
        q, k, v = jnp.split(qkv, 3, axis=-1)                  # contiguous slices, no transpose
        a = attention(q, k, v, mask_bias, n_head=n_head,
                      scale=1.0 / math.sqrt(dh))              # (B, S, d) bf16
        a2 = a.reshape(B * S, d)                              # free view
        # output projection with bias + residual-add fused (in-place on x2)
        x2 = fused_linear(a2, lyr["w_o"], lyr["b_o"], residual=x2)

        # LN2 + FC + GELU fused; bf16 output feeds the down projection.
        ff = fused_linear(x2, lyr["w_fc"], lyr["b_fc"],
                          gamma=lyr["ln2_g"], beta=lyr["ln2_b"],
                          activation="gelu", out_dtype=jnp.bfloat16)
        x2 = fused_linear(ff, lyr["w_proj"], lyr["b_proj"], residual=x2)

    x2 = layernorm(x2, params["lnf_g"], params["lnf_b"])
    return x2.reshape(B, S, d)


# ----------------------------------- main ------------------------------------

if __name__ == "__main__":
    VOCAB, MAX_POS = 64, 16
    B, S, D, H, FF, LAYERS = 2, 8, 32, 2, 128, 2

    key = jax.random.PRNGKey(0)
    k_param, k_ids = jax.random.split(key)
    params = init_params(k_param, VOCAB, MAX_POS, D, H, FF, LAYERS)

    input_ids = jax.random.randint(k_ids, (B, S), 0, VOCAB, dtype=jnp.int32)
    # second sequence padded on the last 3 positions
    attention_mask = jnp.array(
        [[1, 1, 1, 1, 1, 1, 1, 1],
         [1, 1, 1, 1, 1, 0, 0, 0]], dtype=jnp.int32)

    out = text_decoder_forward(input_ids, attention_mask, params)
    jax.block_until_ready(out)
    assert out.shape == (B, S, D) and out.dtype == jnp.float32
    assert bool(jnp.all(jnp.isfinite(out)))
    print("KERNEL_OK")
</pallas_src>

<mosaic_0001>
module attributes {stable_mosaic.version = 11 : i64} {
  func.func @_fused_linear_kernel(%arg0: i32, %arg1: i32, %arg2: i32, %arg3: memref<16x32xf32, #tpu.memory_space<vmem>>, %arg4: memref<32x96xbf16, #tpu.memory_space<vmem>>, %arg5: memref<1x96xf32, #tpu.memory_space<vmem>>, %arg6: memref<1x32xf32, #tpu.memory_space<vmem>>, %arg7: memref<1x32xf32, #tpu.memory_space<vmem>>, %arg8: memref<16x96xbf16, #tpu.memory_space<vmem>>, %arg9: memref<16x96xf32, #tpu.memory_space<vmem>>) attributes {dimension_semantics = [#tpu.dimension_semantics<parallel>, #tpu.dimension_semantics<parallel>, #tpu.dimension_semantics<arbitrary>], iteration_bounds = array<i64: 1, 1, 1>, scalar_prefetch = 0 : i64, scratch_operands = 1 : i64, tpu.core_type = #tpu.core_type<tc>, window_params = [{transform_indices = @transform_0, window_bounds = array<i64: 16, 32>}, {transform_indices = @transform_1, window_bounds = array<i64: 32, 96>}, {transform_indices = @transform_2, window_bounds = array<i64: 1, 96>}, {transform_indices = @transform_3, window_bounds = array<i64: 1, 32>}, {transform_indices = @transform_4, window_bounds = array<i64: 1, 32>}, {transform_indices = @transform_5, window_bounds = array<i64: 16, 96>}]} {
    %c0_i32 = arith.constant 0 : i32
    %0 = arith.cmpi eq, %arg2, %c0_i32 : i32
    %1 = arith.extui %0 : i1 to i32
    %c0_i32_0 = arith.constant 0 : i32
    %2 = arith.cmpi ne, %1, %c0_i32_0 : i32
    scf.if %2 {
      %cst_19 = arith.constant 0.000000e+00 : f32
      %37 = vector.broadcast %cst_19 : f32 to vector<16x96xf32>
      %c0_20 = arith.constant 0 : index
      %c0_21 = arith.constant 0 : index
      %38 = vector.load %arg9[%c0_20, %c0_21] : memref<16x96xf32, #tpu.memory_space<vmem>>, vector<16x96xf32>
      tpu.vector_store %arg9[%c0_20, %c0_21], %37 {strides = array<i32>} : memref<16x96xf32, #tpu.memory_space<vmem>>, vector<16x96xf32>,
    } else {
    }
    %c0 = arith.constant 0 : index
    %c0_1 = arith.constant 0 : index
    %3 = vector.load %arg3[%c0, %c0_1] : memref<16x32xf32, #tpu.memory_space<vmem>>, vector<16x32xf32>
    %cst = arith.constant dense<0.000000e+00> : vector<16xf32>
    %4 = vector.multi_reduction <add>, %3, %cst [1] : vector<16x32xf32> to vector<16xf32>
    %5 = vector.shape_cast %4 : vector<16xf32> to vector<16x1xf32>
    %cst_2 = arith.constant 3.200000e+01 : f32
    %6 = vector.broadcast %cst_2 : f32 to vector<16x1xf32>
    %7 = arith.divf %5, %6 : vector<16x1xf32>
    %8 = vector.broadcast %7 : vector<16x1xf32> to vector<16x32xf32>
    %9 = arith.subf %3, %8 : vector<16x32xf32>
    %10 = arith.mulf %9, %9 : vector<16x32xf32>
    %cst_3 = arith.constant dense<0.000000e+00> : vector<16xf32>
    %11 = vector.multi_reduction <add>, %10, %cst_3 [1] : vector<16x32xf32> to vector<16xf32>
    %12 = vector.shape_cast %11 : vector<16xf32> to vector<16x1xf32>
    %cst_4 = arith.constant 3.200000e+01 : f32
    %13 = vector.broadcast %cst_4 : f32 to vector<16x1xf32>
    %14 = arith.divf %12, %13 : vector<16x1xf32>
    %15 = vector.broadcast %7 : vector<16x1xf32> to vector<16x32xf32>
    %16 = arith.subf %3, %15 : vector<16x32xf32>
    %cst_5 = arith.constant 9.99999974E-6 : f32
    %17 = vector.broadcast %cst_5 : f32 to vector<16x1xf32>
    %18 = arith.addf %14, %17 : vector<16x1xf32>
    %19 = math.rsqrt %18 : vector<16x1xf32>
    %20 = vector.broadcast %19 : vector<16x1xf32> to vector<16x32xf32>
    %21 = arith.mulf %16, %20 : vector<16x32xf32>
    %c0_6 = arith.constant 0 : index
    %c0_7 = arith.constant 0 : index
    %22 = vector.load %arg6[%c0_6, %c0_7] : memref<1x32xf32, #tpu.memory_space<vmem>>, vector<1x32xf32>
    %23 = vector.broadcast %22 : vector<1x32xf32> to vector<16x32xf32>
    %24 = arith.mulf %21, %23 : vector<16x32xf32>
    %c0_8 = arith.constant 0 : index
    %c0_9 = arith.constant 0 : index
    %25 = vector.load %arg7[%c0_8, %c0_9] : memref<1x32xf32, #tpu.memory_space<vmem>>, vector<1x32xf32>
    %26 = vector.broadcast %25 : vector<1x32xf32> to vector<16x32xf32>
    %27 = arith.addf %24, %26 : vector<16x32xf32>
    %c0_10 = arith.constant 0 : index
    %c0_11 = arith.constant 0 : index
    %28 = vector.load %arg9[%c0_10, %c0_11] : memref<16x96xf32, #tpu.memory_space<vmem>>, vector<16x96xf32>
    %29 = arith.truncf %27 : vector<16x32xf32> to vector<16x32xbf16>
    %c0_12 = arith.constant 0 : index
    %c0_13 = arith.constant 0 : index
    %30 = vector.load %arg4[%c0_12, %c0_13] : memref<32x96xbf16, #tpu.memory_space<vmem>>, vector<32x96xbf16>
    %cst_14 = arith.constant dense<0.000000e+00> : vector<16x96xf32>
    %31 = tpu.matmul %29, %30, %cst_14 {dimension_numbers = #tpu.dot_dimension_numbers<[1], [0], [0], [1], [0, 0, 1, 1], [], []>} : vector<16x32xbf16>, vector<32x96xbf16>, vector<16x96xf32> -> vector<16x96xf32>
    %32 = arith.addf %28, %31 : vector<16x96xf32>
    %c0_15 = arith.constant 0 : index
    %c0_16 = arith.constant 0 : index
    %33 = vector.load %arg9[%c0_15, %c0_16] : memref<16x96xf32, #tpu.memory_space<vmem>>, vector<16x96xf32>
    tpu.vector_store %arg9[%c0_15, %c0_16], %32 {strides = array<i32>} : memref<16x96xf32, #tpu.memory_space<vmem>>, vector<16x96xf32>,
    %c0_i32_17 = arith.constant 0 : i32
    %34 = arith.cmpi eq, %arg2, %c0_i32_17 : i32
    %35 = arith.extui %34 : i1 to i32
    %c0_i32_18 = arith.constant 0 : i32
    %36 = arith.cmpi ne, %35, %c0_i32_18 : i32
    scf.if %36 {
      %c0_19 = arith.constant 0 : index
      %c0_20 = arith.constant 0 : index
      %37 = vector.load %arg9[%c0_19, %c0_20] : memref<16x96xf32, #tpu.memory_space<vmem>>, vector<16x96xf32>
      %c0_21 = arith.constant 0 : index
      %c0_22 = arith.constant 0 : index
      %38 = vector.load %arg5[%c0_21, %c0_22] : memref<1x96xf32, #tpu.memory_space<vmem>>, vector<1x96xf32>
      %39 = vector.broadcast %38 : vector<1x96xf32> to vector<16x96xf32>
      %40 = arith.addf %37, %39 : vector<16x96xf32>
      %41 = arith.truncf %40 : vector<16x96xf32> to vector<16x96xbf16>
      %c0_23 = arith.constant 0 : index
      %c0_24 = arith.constant 0 : index
      %42 = vector.load %arg8[%c0_23, %c0_24] : memref<16x96xbf16, #tpu.memory_space<vmem>>, vector<16x96xbf16>
      tpu.vector_store %arg8[%c0_23, %c0_24], %41 {strides = array<i32>} : memref<16x96xbf16, #tpu.memory_space<vmem>>, vector<16x96xbf16>,
    } else {
    }
    return
  }
  func.func @transform_0(%arg0: i32, %arg1: i32, %arg2: i32) -> (i32, i32) {
    %c0_i32 = arith.constant 0 : i32
    return %arg0, %arg2 : i32, i32
  }
  func.func @transform_1(%arg0: i32, %arg1: i32, %arg2: i32) -> (i32, i32) {
    %c0_i32 = arith.constant 0 : i32
    return %arg2, %arg1 : i32, i32
  }
  func.func @transform_2(%arg0: i32, %arg1: i32, %arg2: i32) -> (i32, i32) {
    %c0_i32 = arith.constant 0 : i32
    %c0_i32_0 = arith.constant 0 : i32
    return %c0_i32, %arg1 : i32, i32
  }
  func.func @transform_3(%arg0: i32, %arg1: i32, %arg2: i32) -> (i32, i32) {
    %c0_i32 = arith.constant 0 : i32
    %c0_i32_0 = arith.constant 0 : i32
    return %c0_i32, %arg2 : i32, i32
  }
  func.func @transform_4(%arg0: i32, %arg1: i32, %arg2: i32) -> (i32, i32) {
    %c0_i32 = arith.constant 0 : i32
    %c0_i32_0 = arith.constant 0 : i32
    return %c0_i32, %arg2 : i32, i32
  }
  func.func @transform_5(%arg0: i32, %arg1: i32, %arg2: i32) -> (i32, i32) {
    %c0_i32 = arith.constant 0 : i32
    return %arg0, %arg1 : i32, i32
  }
}

</mosaic_0001>

<llo_original>
// kernel: tpu_custom_call.1
$region0: #{tpu_custom_call.1}
  #allocation0 [shape = 'u32[]', space=smem, size = 0x4, offset = 0x4, fixed_abs, tag = 'smem constant byte address 0x4 - core index']
  #allocation1 [shape = 'u32[144,128]{1,0:T(1,128)}', space=vmem, size = 0x12000, scoped, tag = 'internal scratch']
  #allocation2 [shape = 'f32[16,96]{1,0:T(8,128)}', space=vmem, size = 0x2000, scoped, tag = 'scratch operand']
  %s0 = inlined_call_operand.hbm [shape: f32[16,32], index: 0, kind: input, shape index: {}]
  %s1 = inlined_call_operand.hbm [shape: bf16[32,96], index: 1, kind: input, shape index: {}]
  %s2 = inlined_call_operand.vmem [shape: f32[1,96], index: 2, kind: input, shape index: {}]
  %s3 = inlined_call_operand.vmem [shape: f32[1,32], index: 3, kind: input, shape index: {}]
  %s4 = inlined_call_operand.vmem [shape: f32[1,32], index: 4, kind: input, shape index: {}]
  %s5 = inlined_call_operand.hbm [shape: bf16[16,96], index: 5, kind: output, shape index: {}]
  %s6 = sld [smem:[#allocation0]]
  $region46: #{tpu_custom_call.1} parent=0
    _
  %s8 = ssub.s32 1, %s6
  %s9 = scalar_select 0, %s8, %s6
  $region1: #{tpu_custom_call.1} parent=0
    #allocation3 [shape = 'u8[8192]{0}', space=vmem, size = 0x2000, scoped, tag = 'input window, operand 0, single buffered']
    #allocation4 [shape = 's32[1]{0}', space=sflag, size = 0x4, scoped, tag = 'scoped memory for tpu_custom_call.1']
    #allocation5 [shape = 's32[1]{0}', space=sflag, size = 0x4, scoped, tag = 'scoped memory for tpu_custom_call.1']
    #allocation6 [shape = 'u8[8192]{0}', space=vmem, size = 0x2000, scoped, tag = 'input window, operand 1, single buffered']
    #allocation7 [shape = 's32[1]{0}', space=sflag, size = 0x4, scoped, tag = 'scoped memory for tpu_custom_call.1']
    #allocation8 [shape = 'u8[4096]{0}', space=vmem, size = 0x1000, scoped, tag = 'output window, operand 0, single buffered']
    %10 = vsyncpa [#allocation4], 0
    %11 = vsyncpa [#allocation7], 0
    %12 = vsyncpa [#allocation5], 0
    // Predicated region
    $region2: #{tpu_custom_call.1} parent=1 // pred_check
      _
    $region3: #{tpu_custom_call.1} parent=1 // pred_check_branch
      %14 = sbr.rel (0) target = $region5
    $region4: #{tpu_custom_call.1} parent=1 // pred_region
      %s16 = ssub.s32 256, 256
      %17 = vsyncadd [#allocation4], %s16
      %s18 = sshll.u32 [#allocation3], 4
      %s19 = int_to_ptr.vmem [resolvable:$true] %s18
      %24 = dma.hbm_to_vmem [thread:$0]  %s0, 256, %s19, [#allocation4], 128, 128, 8
    $region5: #{tpu_custom_call.1} parent=1 // pred_fallthru
      _
    // Predicated region
    $region6: #{tpu_custom_call.1} parent=1 // pred_check
      _
    $region7: #{tpu_custom_call.1} parent=1 // pred_check_branch
      %26 = sbr.rel (0) target = $region9
    $region8: #{tpu_custom_call.1} parent=1 // pred_region
      %s28 = ssub.s32 256, 256
      %29 = vsyncadd [#allocation7], %s28
      %s30 = sshll.u32 [#allocation6], 4
      %s31 = int_to_ptr.vmem [resolvable:$true] %s30
      %36 = dma.hbm_to_vmem [thread:$0]  %s1, 256, %s31, [#allocation7], 64, 64, 4
    $region9: #{tpu_custom_call.1} parent=1 // pred_fallthru
      _
    // Predicated region
    $region10: #{tpu_custom_call.1} parent=1 // pred_check
      _
    $region11: #{tpu_custom_call.1} parent=1 // pred_check_branch
      %38 = sbr.rel (0) target = $region13
    $region12: #{tpu_custom_call.1} parent=1 // pred_region
      _
    $region13: #{tpu_custom_call.1} parent=1 // pred_fallthru
      _
    // Predicated region
    $region14: #{tpu_custom_call.1} parent=1 // pred_check
      _
    $region15: #{tpu_custom_call.1} parent=1 // pred_check_branch
      %40 = sbr.rel (0) target = $region17
    $region16: #{tpu_custom_call.1} parent=1 // pred_region
      _
    $region17: #{tpu_custom_call.1} parent=1 // pred_fallthru
      _
    // Predicated region
    $region18: #{tpu_custom_call.1} parent=1 // pred_check
      _
    $region19: #{tpu_custom_call.1} parent=1 // pred_check_branch
      %42 = sbr.rel (0) target = $region21
    $region20: #{tpu_custom_call.1} parent=1 // pred_region
      _
    $region21: #{tpu_custom_call.1} parent=1 // pred_fallthru
      _
    // Predicated region
    $region22: #{tpu_custom_call.1} parent=1 // pred_check
      _
    $region23: #{tpu_custom_call.1} parent=1 // pred_check_branch
      %44 = sbr.rel (0) target = $region25
    $region24: #{tpu_custom_call.1} parent=1 // pred_region
      %45 = dma.done [#allocation4], 256
    $region25: #{tpu_custom_call.1} parent=1 // pred_fallthru
      _
    // Predicated region
    $region26: #{tpu_custom_call.1} parent=1 // pred_check
      _
    $region27: #{tpu_custom_call.1} parent=1 // pred_check_branch
      %47 = sbr.rel (0) target = $region29
    $region28: #{tpu_custom_call.1} parent=1 // pred_region
      %48 = dma.done [#allocation7], 256
    $region29: #{tpu_custom_call.1} parent=1 // pred_fallthru
      _
    %p50 = scmp.eq.s32.totalorder 0, 0
    // Predicated region
    $region30: #{tpu_custom_call.1} parent=1 // pred_check
      %p51 = pneg %p50
    $region31: #{tpu_custom_call.1} parent=1 // pred_check_branch
      %53 = sbr.rel (%p51) target = $region33
    $region32: #{tpu_custom_call.1} parent=1 // pred_region
      %vm54 = vcmask 785408
      %55 = vst.msk [vmem:[#allocation2] sm:$0xff] %vm54, 0.0
      %56 = vst.msk [vmem:[#allocation2 + $0x8] sm:$0xff] %vm54, 0.0
    $region33: #{tpu_custom_call.1} parent=1 // pred_fallthru
      _
    %v57 = vld [vmem:[#allocation3] sm:$0xff]
    %v58 = vld [vmem:[#allocation3 + $0x8] sm:$0xff]
    %vm59 = vcmask 261120
    %v60 = vsel %vm59, %v57, 0.0
    %61 = vadd.xlane.f32.xlu0 %v60
    %v62 = vpop.xlane.xlu0 %61
    %v63 = vsel %vm59, %v58, 0.0
    %64 = vadd.xlane.f32.xlu0 %v63
    %v65 = vpop.xlane.xlu0 %64
    %v66 = vrcp.pop 32.0
    %v67 = vmul.f32 %v62, %v66
    %v68 = vmul.f32 %v65, %v66
    %v69 = vsub.f32 %v57, %v67
    %v70 = vsub.f32 %v58, %v68
    %v71 = vmul.f32 %v69, %v69
    %v72 = vmul.f32 %v70, %v70
    %v73 = vsel %vm59, %v71, 0.0
    %74 = vadd.xlane.f32.xlu0 %v73
    %v75 = vpop.xlane.xlu0 %74
    %v76 = vsel %vm59, %v72, 0.0
    %77 = vadd.xlane.f32.xlu0 %v76
    %v78 = vpop.xlane.xlu0 %77
    %v79 = vmul.f32 %v75, %v66
    %v80 = vmul.f32 %v78, %v66
    %v81 = vadd.f32 %v79, 1e-05
    %v82 = vadd.f32 %v80, 1e-05
    %v83 = vrsqrt.pop %v81
    %v84 = vrsqrt.pop %v82
    %v85 = vmul.f32 %v69, %v83
    %v86 = vmul.f32 %v70, %v84
    %v87 = vld [vmem:[%s3] sm:$0x1]
    %v89 = vlaneseq
    %v90 = vshrl.u32 %v89, 7
    %v91 = vsub.s32 0, %v90
    %v92 = vrot.slane %v87, %v91
    %v94 = vmul.f32 %v85, %v92
    %v95 = vmul.f32 %v86, %v92
    %v96 = vld [vmem:[%s4] sm:$0x1]
    %v98 = vlaneseq
    %v99 = vshrl.u32 %v98, 7
    %v100 = vsub.s32 0, %v99
    %v101 = vrot.slane %v96, %v100
    %v103 = vadd.f32 %v94, %v101
    %v104 = vadd.f32 %v95, %v101
    %v105 = vld [vmem:[#allocation2] sm:$0xff]
    %v106 = vld [vmem:[#allocation2 + $0x8] sm:$0xff]
    %v107 = vpack.c.bf16 %v104, %v103
    %v108 = vld [vmem:[#allocation6] sm:$0xf]
    %v109 = vld [vmem:[#allocation6 + $0x4] sm:$0xf]
    %v110 = vld [vmem:[#allocation6 + $0x8] sm:$0xf]
    %v111 = vld [vmem:[#allocation6 + $0xc] sm:$0xf]
    %v116 = vunpack.c.l.b16 %v108
    %v117 = vunpack.c.l.b16 %v109
    %v118 = vunpack.c.l.b16 %v110
    %v119 = vunpack.c.l.b16 %v111
    %v120 = vpack.c.b16 %v117, %v116
    %v121 = vpack.c.b16 %v119, %v118
    %v125 = vsel %vm59, %v107, 0
    %127 = vmatprep.subr.bf16.mxu0 0
    %128 = vmatpush1.bf16.msra.mxu0 %v120
    %129 = vmatprep.subr.bf16.mxu0 0
    %130 = vmatpush1.bf16.msra.mxu0 %v121
    %131 = vmatprep.subr.bf16.mxu0 0
    %132 = vmatpush1.bf16.msra.mxu0 0
    %133 = vmatprep.subr.bf16.mxu0 0
    %134 = vmatpush1.bf16.msra.mxu0 0
    %135 = vmatprep.subr.bf16.mxu0 0
    %136 = vmatpush1.bf16.msra.mxu0 0
    %137 = vmatprep.subr.bf16.mxu0 0
    %138 = vmatpush1.bf16.msra.mxu0 0
    %139 = vmatprep.subr.bf16.mxu0 0
    %140 = vmatpush1.bf16.msra.mxu0 0
    %141 = vmatprep.subr.bf16.mxu0 0
    %142 = vmatpush1.bf16.msra.mxu0 0
    %143 = vmatprep.subr.bf16.mxu0 0
    %144 = vmatpush1.bf16.msra.mxu0 0
    %145 = vmatprep.subr.bf16.mxu0 0
    %146 = vmatpush1.bf16.msra.mxu0 0
    %147 = vmatprep.subr.bf16.mxu0 0
    %148 = vmatpush1.bf16.msra.mxu0 0
    %149 = vmatprep.subr.bf16.mxu0 0
    %150 = vmatpush1.bf16.msra.mxu0 0
    %151 = vmatprep.subr.bf16.mxu0 0
    %152 = vmatpush1.bf16.msra.mxu0 0
    %153 = vmatprep.subr.bf16.mxu0 0
    %154 = vmatpush1.bf16.msra.mxu0 0
    %155 = vmatprep.subr.bf16.mxu0 0
    %156 = vmatpush1.bf16.msra.mxu0 0
    %157 = vmatprep.subr.bf16.mxu0 0
    %158 = vmatpush1.bf16.msra.mxu0 0
    %159 = vmatprep.mubr.bf16.mxu0 0
    %160 = vmatmul.mubr.bf16.gmra.mrb[0].mxu0 %v125
    %v161 = vpop.f32.mrb[0].mxu0
    %v162 = vadd.f32 0.0, %v161
    %v163 = vpop.f32.mrb[0].mxu0
    %v164 = vpop.f32.mrb[0].mxu0
    %v165 = vadd.f32 0.0, %v164
    %v166 = vpop.f32.mrb[0].mxu0
    %167 = vdwg.mxu0
    %v168 = vadd.f32 %v105, %v162
    %v169 = vadd.f32 %v106, %v165
    %vm170 = vcmask 785408
    %171 = vst.msk [vmem:[#allocation2] sm:$0xff] %vm170, %v168
    %172 = vst.msk [vmem:[#allocation2 + $0x8] sm:$0xff] %vm170, %v169
    // Predicated region
    $region34: #{tpu_custom_call.1} parent=1 // pred_check
      %p173 = pneg %p50
    $region35: #{tpu_custom_call.1} parent=1 // pred_check_branch
      %175 = sbr.rel (%p173) target = $region37
    $region36: #{tpu_custom_call.1} parent=1 // pred_region
      %v176 = vld [vmem:[#allocation2] sm:$0xff]
      %v177 = vld [vmem:[#allocation2 + $0x8] sm:$0xff]
      %v178 = vld [vmem:[%s2] sm:$0x1]
      %v180 = vlaneseq
      %v181 = vshrl.u32 %v180, 7
      %v182 = vsub.s32 0, %v181
      %v183 = vrot.slane %v178, %v182
      %v185 = vadd.f32 %v176, %v183
      %v186 = vadd.f32 %v177, %v183
      %v187 = vpack.c.bf16 %v186, %v185
      %v189 = vunpack.c.l.b16 %v187
      %v190 = vunpack.c.h.b16 %v187
      %v191 = vpack.c.b16 %v189, %v189
      %v192 = vpack.c.b16 %v190, %v190
      %vm195 = vcmask 781312
      %196 = vst.msk [vmem:[#allocation8] sm:$0xf] %vm195, %v191
      %197 = vst.msk [vmem:[#allocation8 + $0x4] sm:$0xf] %vm195, %v192
    $region37: #{tpu_custom_call.1} parent=1 // pred_fallthru
      _
    // Predicated region
    $region38: #{tpu_custom_call.1} parent=1 // pred_check
      _
    $region39: #{tpu_custom_call.1} parent=1 // pred_check_branch
      %199 = sbr.rel (0) target = $region41
    $region40: #{tpu_custom_call.1} parent=1 // pred_region
      %s201 = ssub.s32 128, 128
      %202 = vsyncadd [#allocation5], %s201
      %s203 = sshll.u32 [#allocation8], 4
      %s204 = int_to_ptr.vmem [resolvable:$true] %s203
      %209 = dma.vmem_to_hbm [thread:$0]  %s204, 128, %s5, [#allocation5], 64, 64, 4
    $region41: #{tpu_custom_call.1} parent=1 // pred_fallthru
      _
    // Predicated region
    $region42: #{tpu_custom_call.1} parent=1 // pred_check
      _
    $region43: #{tpu_custom_call.1} parent=1 // pred_check_branch
      %211 = sbr.rel (0) target = $region45
    $region44: #{tpu_custom_call.1} parent=1 // pred_region
      %212 = dma.done [#allocation5], 128
    $region45: #{tpu_custom_call.1} parent=1 // pred_fallthru
      _
    %213 = vsyncpa [#allocation4], 1
    %214 = vsyncpa [#allocation7], 1
    %215 = vsyncpa [#allocation5], 1

</llo_original>
